<compile_context>
chip_gen: v7x
topology: tpu7x:2x2x1
jax: 0.10.0
libtpu: 0.0.40
codegen_flags: <defaults>
</compile_context>

<pallas_src>
import functools

import jax
import jax.numpy as jnp
from jax.experimental import pallas as pl
from jax.experimental.pallas import tpu as pltpu


def _fused_kernel(x_ref, w_ref, gb_ref, mask_ref, sel_ref, o_ref,
                  sum_ref, sumsq_ref, *, K, pool, eps, inv_count):
    """Phased body. p==0: accumulate BN batch stats. p==1: BN + ReLU + MaxPool."""
    p = pl.program_id(0)          # phase
    n = pl.program_id(1)          # batch tile

    @pl.when(jnp.logical_and(p == 0, n == 0))
    def _init():
        sum_ref[...] = jnp.zeros_like(sum_ref)
        sumsq_ref[...] = jnp.zeros_like(sumsq_ref)

    # ---- Conv1d ('same', stride 1) on NB lane-packed batch elements ---------
    # Tap k needs x shifted by s = K//2 - k with zero fill at each batch
    # segment's edges: pltpu.roll (XLU) + precomputed 0/1 edge mask, then a
    # single im2col matmul (one MXU push for all K taps).
    xp = x_ref[...]                               # (Cin, NB*L)
    NBL = xp.shape[1]
    pad = K // 2
    mask_all = mask_ref[...]                      # (K, NB*L) 0/1
    parts = []
    for k in range(K):
        s = pad - k
        if s == 0:
            parts.append(xp)
        else:
            parts.append(pltpu.roll(xp, s % NBL, axis=1) * mask_all[k:k + 1, :])
    taps = jnp.concatenate(parts, axis=0)         # (K*Cin, NB*L)
    conv = jnp.dot(w_ref[...], taps,
                   preferred_element_type=jnp.float32)      # (Cout, NB*L) f32

    @pl.when(p == 0)
    def _accumulate():
        sum_ref[...] += jnp.sum(conv, axis=1, keepdims=True)        # (Cout, 1)
        sumsq_ref[...] += jnp.sum(conv * conv, axis=1, keepdims=True)

    @pl.when(p == 1)
    def _finalize():
        mean = sum_ref[...] * inv_count                             # (Cout, 1)
        var = sumsq_ref[...] * inv_count - mean * mean              # biased var
        scale = gb_ref[:, 0:1] * jax.lax.rsqrt(var + eps)
        shift = gb_ref[:, 1:2] - mean * scale
        y = jnp.maximum(conv * scale + shift, 0.0)                  # BN + ReLU

        # MaxPool1d(pool): running max via lane rolls (every selected window
        # start keeps its window inside its batch segment), then a 0/1
        # selection matmul picks window starts -> lane-dense (Cout, NB*Lo) store.
        z = y
        for q in range(1, pool):
            z = jnp.maximum(z, pltpu.roll(y, (-q) % NBL, axis=1))
        o_ref[...] = jnp.dot(z, sel_ref[...],
                             preferred_element_type=jnp.float32)


def conv_1d_forward(x, weight, bias, gamma, beta, *, pool=2, eps=1e-5,
                    compute_dtype=jnp.float32):
    """Forward of Conv_1d.  x: (N, Cin, L) NCL -> (N, Cout, L // pool) NCL."""
    N, Cin, L = x.shape
    Cout, Cin_w, K = weight.shape
    assert Cin_w == Cin
    assert K % 2 == 1, "padding=K//2 is only 'same' for odd K"
    # TODO(synk): stride != 1 is not supported (module default is stride=1).
    Lo = L // pool
    pad = K // 2
    del bias   # per-channel constant: cancels exactly in BatchNorm's (x - mean)

    cdt = compute_dtype
    # (Cout, Cin, K) -> (Cout, K*Cin) im2col weight matching the tap stacking.
    w2 = jnp.transpose(weight, (0, 2, 1)).reshape(Cout, K * Cin).astype(cdt)
    gb = jnp.stack([gamma, beta], axis=1).astype(jnp.float32)       # (Cout, 2)

    # Batch tile NB: pack NB batch elements along the lane axis per grid step.
    # Prefer NB*Lo a multiple of 128 (dense output stores); keep NB*L ~<= 1024.
    cap = min(N, max(1, 1024 // max(L, 1)))
    NB = cap
    for nb in range(cap, 0, -1):
        if (nb * Lo) % 128 == 0:
            NB = nb
            break
    if NB < N and ((NB * Lo) % 128 != 0 or (NB * L) % 128 != 0):
        # Tiled lane dims must be multiples of 128; otherwise fall back to one
        # whole-batch tile (blocks == full arrays are always legal).
        # TODO(synk): for very long L, additionally tile L with a (K-1) halo.
        NB = N
    NT = -(-N // NB)
    N_pad = NT * NB
    NBL = NB * L

    # Lane-packed input: (N, Cin, L) -> (Cin, N_pad*L) (tiny layout plumbing).
    xp = jnp.transpose(x, (1, 0, 2)).astype(cdt)                    # (Cin, N, L)
    if N_pad != N:
        # Zero batches: conv(0) = 0 (bias dropped) so they add nothing to stats.
        xp = jnp.pad(xp, ((0, 0), (0, N_pad - N), (0, 0)))
    xp = xp.reshape(Cin, N_pad * L)

    # Host-precomputed constants (resident blocks; never rebuilt per step).
    lpos = jnp.arange(NBL, dtype=jnp.int32) % L
    mask = jnp.stack(
        [((lpos - (pad - k) >= 0) & (lpos - (pad - k) < L)) for k in range(K)]
    ).astype(cdt)                                                   # (K, NB*L)
    ii = jnp.arange(NBL, dtype=jnp.int32)[:, None]
    jj = jnp.arange(NB * Lo, dtype=jnp.int32)[None, :]
    sel = (ii == (jj // Lo) * L + pool * (jj % Lo)).astype(jnp.float32)

    x_spec = pl.BlockSpec((Cin, NBL), lambda p, n: (0, n))
    w_spec = pl.BlockSpec((Cout, K * Cin), lambda p, n: (0, 0))
    gb_spec = pl.BlockSpec((Cout, 2), lambda p, n: (0, 0))
    m_spec = pl.BlockSpec((K, NBL), lambda p, n: (0, 0))
    s_spec = pl.BlockSpec((NBL, NB * Lo), lambda p, n: (0, 0))
    # Phase 0 never writes: pin its (unwritten) output block index to 0 so no
    # garbage write-back happens; phase 1 walks the batch tiles.
    o_spec = pl.BlockSpec((Cout, NB * Lo), lambda p, n: (0, n * p))

    out2 = pl.pallas_call(
        functools.partial(_fused_kernel, K=K, pool=pool, eps=float(eps),
                          inv_count=1.0 / float(N * L)),
        out_shape=jax.ShapeDtypeStruct((Cout, N_pad * Lo), jnp.float32),
        grid=(2, NT),
        in_specs=[x_spec, w_spec, gb_spec, m_spec, s_spec],
        out_specs=o_spec,
        scratch_shapes=[pltpu.VMEM((Cout, 1), jnp.float32),
                        pltpu.VMEM((Cout, 1), jnp.float32)],
        compiler_params=pltpu.CompilerParams(
            # Phase axis is sequential through the stats scratch; the batch
            # axis reduces into it in phase 0 -> both "arbitrary".
            # TODO(synk): for large N on v7x, split the stats phase across the
            # two TensorCores (partial sums) instead of this fused single-core form.
            dimension_semantics=("arbitrary", "arbitrary"),
            vmem_limit_bytes=32 * 1024 * 1024),
    )(xp, w2, gb, mask, sel)

    # (Cout, N_pad*Lo) -> (N, Cout, Lo): wrapper-side layout plumbing.
    return out2.reshape(Cout, N_pad, Lo).transpose(1, 0, 2)[:N]


def _reference(x, weight, bias, gamma, beta, *, pool=2, eps=1e-5):
    """Pure-JAX reference of the PyTorch forward (training-mode BN)."""
    N, Cin, L = x.shape
    Cout, _, K = weight.shape
    pad = K // 2
    xp = jnp.pad(x, ((0, 0), (0, 0), (pad, pad)))
    windows = jnp.stack([xp[:, :, k:k + L] for k in range(K)], axis=2)  # (N,Cin,K,L)
    conv = jnp.einsum('nikl,oik->nol', windows, weight) + bias[None, :, None]
    mean = conv.mean(axis=(0, 2), keepdims=True)
    var = ((conv - mean) ** 2).mean(axis=(0, 2), keepdims=True)
    y = gamma[None, :, None] * (conv - mean) / jnp.sqrt(var + eps) + beta[None, :, None]
    y = jnp.maximum(y, 0.0)
    Lo = L // pool
    return y[:, :, :Lo * pool].reshape(N, Cout, Lo, pool).max(axis=-1)


if __name__ == "__main__":
    # Conv_1d(input_channels=4, output_channels=8, shape=3, stride=1, pooling=2)
    # applied to x of shape (N=2, C=4, L=128).  L=128 keeps the lane axis dense.
    N, Cin, L = 2, 4, 128
    Cout, K, POOL = 8, 3, 2

    key = jax.random.PRNGKey(0)
    kx, kw, kb, kg, kbeta = jax.random.split(key, 5)
    x = jax.random.normal(kx, (N, Cin, L), dtype=jnp.float32)
    weight = 0.1 * jax.random.normal(kw, (Cout, Cin, K), dtype=jnp.float32)
    bias = 0.1 * jax.random.normal(kb, (Cout,), dtype=jnp.float32)
    gamma = 1.0 + 0.1 * jax.random.normal(kg, (Cout,), dtype=jnp.float32)
    beta = 0.1 * jax.random.normal(kbeta, (Cout,), dtype=jnp.float32)

    out = conv_1d_forward(x, weight, bias, gamma, beta, pool=POOL)
    out = jax.block_until_ready(out)

    ref = _reference(x, weight, bias, gamma, beta, pool=POOL)
    assert out.shape == (N, Cout, L // POOL), out.shape
    max_err = float(jnp.max(jnp.abs(out - ref)))
    assert jnp.allclose(out, ref, rtol=2e-3, atol=2e-3), max_err

    print("KERNEL_OK")
</pallas_src>

<mosaic_0001>
module attributes {stable_mosaic.version = 11 : i64} {
  func.func @_fused_kernel(%arg0: i32, %arg1: i32, %arg2: memref<4x256xf32, #tpu.memory_space<vmem>>, %arg3: memref<8x12xf32, #tpu.memory_space<vmem>>, %arg4: memref<8x2xf32, #tpu.memory_space<vmem>>, %arg5: memref<3x256xf32, #tpu.memory_space<vmem>>, %arg6: memref<256x128xf32, #tpu.memory_space<vmem>>, %arg7: memref<8x128xf32, #tpu.memory_space<vmem>>, %arg8: memref<8x1xf32, #tpu.memory_space<vmem>>, %arg9: memref<8x1xf32, #tpu.memory_space<vmem>>) attributes {dimension_semantics = [#tpu.dimension_semantics<arbitrary>, #tpu.dimension_semantics<arbitrary>], iteration_bounds = array<i64: 2, 1>, scalar_prefetch = 0 : i64, scratch_operands = 2 : i64, tpu.core_type = #tpu.core_type<tc>, window_params = [{transform_indices = @transform_0, window_bounds = array<i64: 4, 256>}, {pipeline_mode = #tpu.pipeline_mode<synchronous>, transform_indices = @transform_1, window_bounds = array<i64: 8, 12>}, {pipeline_mode = #tpu.pipeline_mode<synchronous>, transform_indices = @transform_2, window_bounds = array<i64: 8, 2>}, {pipeline_mode = #tpu.pipeline_mode<synchronous>, transform_indices = @transform_3, window_bounds = array<i64: 3, 256>}, {pipeline_mode = #tpu.pipeline_mode<synchronous>, transform_indices = @transform_4, window_bounds = array<i64: 256, 128>}, {transform_indices = @transform_5, window_bounds = array<i64: 8, 128>}]} {
    %c0_i32 = arith.constant 0 : i32
    %0 = arith.cmpi eq, %arg0, %c0_i32 : i32
    %c0_i32_0 = arith.constant 0 : i32
    %1 = arith.cmpi eq, %arg1, %c0_i32_0 : i32
    %2 = arith.andi %0, %1 : i1
    %3 = arith.extui %2 : i1 to i32
    %c0_i32_1 = arith.constant 0 : i32
    %4 = arith.cmpi ne, %3, %c0_i32_1 : i32
    scf.if %4 {
      %cst_11 = arith.constant 0.000000e+00 : f32
      %24 = vector.broadcast %cst_11 : f32 to vector<8x1xf32>
      %c0_12 = arith.constant 0 : index
      %c0_13 = arith.constant 0 : index
      %25 = vector.load %arg8[%c0_12, %c0_13] : memref<8x1xf32, #tpu.memory_space<vmem>>, vector<8x1xf32>
      tpu.vector_store %arg8[%c0_12, %c0_13], %24 {strides = array<i32>} : memref<8x1xf32, #tpu.memory_space<vmem>>, vector<8x1xf32>,
      %cst_14 = arith.constant 0.000000e+00 : f32
      %26 = vector.broadcast %cst_14 : f32 to vector<8x1xf32>
      %c0_15 = arith.constant 0 : index
      %c0_16 = arith.constant 0 : index
      %27 = vector.load %arg9[%c0_15, %c0_16] : memref<8x1xf32, #tpu.memory_space<vmem>>, vector<8x1xf32>
      tpu.vector_store %arg9[%c0_15, %c0_16], %26 {strides = array<i32>} : memref<8x1xf32, #tpu.memory_space<vmem>>, vector<8x1xf32>,
    } else {
    }
    %c0 = arith.constant 0 : index
    %c0_2 = arith.constant 0 : index
    %5 = vector.load %arg2[%c0, %c0_2] : memref<4x256xf32, #tpu.memory_space<vmem>>, vector<4x256xf32>
    %c0_3 = arith.constant 0 : index
    %c0_4 = arith.constant 0 : index
    %6 = vector.load %arg5[%c0_3, %c0_4] : memref<3x256xf32, #tpu.memory_space<vmem>>, vector<3x256xf32>
    %c1_i32 = arith.constant 1 : i32
    %7 = tpu.dynamic_rotate %5 by %c1_i32 dim 1 : vector<4x256xf32>, i32 -> vector<4x256xf32>
    %8 = vector.extract_strided_slice %6 {offsets = [0, 0], sizes = [1, 256], strides = [1, 1]} : vector<3x256xf32> to vector<1x256xf32>
    %9 = vector.broadcast %8 : vector<1x256xf32> to vector<4x256xf32>
    %10 = arith.mulf %7, %9 : vector<4x256xf32>
    %c255_i32 = arith.constant 255 : i32
    %11 = tpu.dynamic_rotate %5 by %c255_i32 dim 1 : vector<4x256xf32>, i32 -> vector<4x256xf32>
    %12 = vector.extract_strided_slice %6 {offsets = [2, 0], sizes = [1, 256], strides = [1, 1]} : vector<3x256xf32> to vector<1x256xf32>
    %13 = vector.broadcast %12 : vector<1x256xf32> to vector<4x256xf32>
    %14 = arith.mulf %11, %13 : vector<4x256xf32>
    %15 = tpu.concatenate %10, %5, %14 in 0 : vector<4x256xf32>, vector<4x256xf32>, vector<4x256xf32> -> vector<12x256xf32>
    %c0_5 = arith.constant 0 : index
    %c0_6 = arith.constant 0 : index
    %16 = vector.load %arg3[%c0_5, %c0_6] : memref<8x12xf32, #tpu.memory_space<vmem>>, vector<8x12xf32>
    %cst = arith.constant dense<0.000000e+00> : vector<8x256xf32>
    %17 = tpu.matmul %16, %15, %cst {dimension_numbers = #tpu.dot_dimension_numbers<[1], [0], [0], [1], [0, 0, 1, 1], [], []>} : vector<8x12xf32>, vector<12x256xf32>, vector<8x256xf32> -> vector<8x256xf32>
    %c0_i32_7 = arith.constant 0 : i32
    %18 = arith.cmpi eq, %arg0, %c0_i32_7 : i32
    %19 = arith.extui %18 : i1 to i32
    %c0_i32_8 = arith.constant 0 : i32
    %20 = arith.cmpi ne, %19, %c0_i32_8 : i32
    scf.if %20 {
      %c0_11 = arith.constant 0 : index
      %c0_12 = arith.constant 0 : index
      %24 = vector.load %arg8[%c0_11, %c0_12] : memref<8x1xf32, #tpu.memory_space<vmem>>, vector<8x1xf32>
      %cst_13 = arith.constant dense<0.000000e+00> : vector<8xf32>
      %25 = vector.multi_reduction <add>, %17, %cst_13 [1] : vector<8x256xf32> to vector<8xf32>
      %26 = vector.shape_cast %25 : vector<8xf32> to vector<8x1xf32>
      %27 = arith.addf %24, %26 : vector<8x1xf32>
      %c0_14 = arith.constant 0 : index
      %c0_15 = arith.constant 0 : index
      %28 = vector.load %arg8[%c0_14, %c0_15] : memref<8x1xf32, #tpu.memory_space<vmem>>, vector<8x1xf32>
      tpu.vector_store %arg8[%c0_14, %c0_15], %27 {strides = array<i32>} : memref<8x1xf32, #tpu.memory_space<vmem>>, vector<8x1xf32>,
      %c0_16 = arith.constant 0 : index
      %c0_17 = arith.constant 0 : index
      %29 = vector.load %arg9[%c0_16, %c0_17] : memref<8x1xf32, #tpu.memory_space<vmem>>, vector<8x1xf32>
      %30 = arith.mulf %17, %17 : vector<8x256xf32>
      %cst_18 = arith.constant dense<0.000000e+00> : vector<8xf32>
      %31 = vector.multi_reduction <add>, %30, %cst_18 [1] : vector<8x256xf32> to vector<8xf32>
      %32 = vector.shape_cast %31 : vector<8xf32> to vector<8x1xf32>
      %33 = arith.addf %29, %32 : vector<8x1xf32>
      %c0_19 = arith.constant 0 : index
      %c0_20 = arith.constant 0 : index
      %34 = vector.load %arg9[%c0_19, %c0_20] : memref<8x1xf32, #tpu.memory_space<vmem>>, vector<8x1xf32>
      tpu.vector_store %arg9[%c0_19, %c0_20], %33 {strides = array<i32>} : memref<8x1xf32, #tpu.memory_space<vmem>>, vector<8x1xf32>,
    } else {
    }
    %c1_i32_9 = arith.constant 1 : i32
    %21 = arith.cmpi eq, %arg0, %c1_i32_9 : i32
    %22 = arith.extui %21 : i1 to i32
    %c0_i32_10 = arith.constant 0 : i32
    %23 = arith.cmpi ne, %22, %c0_i32_10 : i32
    scf.if %23 {
      %c0_11 = arith.constant 0 : index
      %c0_12 = arith.constant 0 : index
      %24 = vector.load %arg8[%c0_11, %c0_12] : memref<8x1xf32, #tpu.memory_space<vmem>>, vector<8x1xf32>
      %cst_13 = arith.constant 3.906250e-03 : f32
      %25 = vector.broadcast %cst_13 : f32 to vector<8x1xf32>
      %26 = arith.mulf %24, %25 : vector<8x1xf32>
      %c0_14 = arith.constant 0 : index
      %c0_15 = arith.constant 0 : index
      %27 = vector.load %arg9[%c0_14, %c0_15] : memref<8x1xf32, #tpu.memory_space<vmem>>, vector<8x1xf32>
      %cst_16 = arith.constant 3.906250e-03 : f32
      %28 = vector.broadcast %cst_16 : f32 to vector<8x1xf32>
      %29 = arith.mulf %27, %28 : vector<8x1xf32>
      %30 = arith.mulf %26, %26 : vector<8x1xf32>
      %31 = arith.subf %29, %30 : vector<8x1xf32>
      %c0_17 = arith.constant 0 : index
      %c0_18 = arith.constant 0 : index
      %32 = vector.load %arg4[%c0_17, %c0_18] : memref<8x2xf32, #tpu.memory_space<vmem>>, vector<8x1xf32>
      %cst_19 = arith.constant 9.99999974E-6 : f32
      %33 = vector.broadcast %cst_19 : f32 to vector<8x1xf32>
      %34 = arith.addf %31, %33 : vector<8x1xf32>
      %35 = math.rsqrt %34 : vector<8x1xf32>
      %36 = arith.mulf %32, %35 : vector<8x1xf32>
      %c0_20 = arith.constant 0 : index
      %c1 = arith.constant 1 : index
      %37 = vector.load %arg4[%c0_20, %c1] : memref<8x2xf32, #tpu.memory_space<vmem>>, vector<8x1xf32>
      %38 = arith.mulf %26, %36 : vector<8x1xf32>
      %39 = arith.subf %37, %38 : vector<8x1xf32>
      %40 = vector.broadcast %36 : vector<8x1xf32> to vector<8x256xf32>
      %41 = arith.mulf %17, %40 : vector<8x256xf32>
      %42 = vector.broadcast %39 : vector<8x1xf32> to vector<8x256xf32>
      %43 = arith.addf %41, %42 : vector<8x256xf32>
      %cst_21 = arith.constant 0.000000e+00 : f32
      %44 = vector.broadcast %cst_21 : f32 to vector<8x256xf32>
      %45 = arith.maximumf %43, %44 : vector<8x256xf32>
      %c255_i32_22 = arith.constant 255 : i32
      %46 = tpu.dynamic_rotate %45 by %c255_i32_22 dim 1 : vector<8x256xf32>, i32 -> vector<8x256xf32>
      %47 = arith.maximumf %45, %46 : vector<8x256xf32>
      %c0_23 = arith.constant 0 : index
      %c0_24 = arith.constant 0 : index
      %48 = vector.load %arg6[%c0_23, %c0_24] : memref<256x128xf32, #tpu.memory_space<vmem>>, vector<256x128xf32>
      %cst_25 = arith.constant dense<0.000000e+00> : vector<8x128xf32>
      %49 = tpu.matmul %47, %48, %cst_25 {dimension_numbers = #tpu.dot_dimension_numbers<[1], [0], [0], [1], [0, 0, 1, 1], [], []>} : vector<8x256xf32>, vector<256x128xf32>, vector<8x128xf32> -> vector<8x128xf32>
      %c0_26 = arith.constant 0 : index
      %c0_27 = arith.constant 0 : index
      %50 = vector.load %arg7[%c0_26, %c0_27] : memref<8x128xf32, #tpu.memory_space<vmem>>, vector<8x128xf32>
      tpu.vector_store %arg7[%c0_26, %c0_27], %49 {strides = array<i32>} : memref<8x128xf32, #tpu.memory_space<vmem>>, vector<8x128xf32>,
    } else {
    }
    return
  }
  func.func @transform_0(%arg0: i32, %arg1: i32) -> (i32, i32) {
    %c0_i32 = arith.constant 0 : i32
    %c0_i32_0 = arith.constant 0 : i32
    return %c0_i32, %arg1 : i32, i32
  }
  func.func @transform_1(%arg0: i32, %arg1: i32) -> (i32, i32) {
    %c0_i32 = arith.constant 0 : i32
    %c0_i32_0 = arith.constant 0 : i32
    %c0_i32_1 = arith.constant 0 : i32
    return %c0_i32, %c0_i32_0 : i32, i32
  }
  func.func @transform_2(%arg0: i32, %arg1: i32) -> (i32, i32) {
    %c0_i32 = arith.constant 0 : i32
    %c0_i32_0 = arith.constant 0 : i32
    %c0_i32_1 = arith.constant 0 : i32
    return %c0_i32, %c0_i32_0 : i32, i32
  }
  func.func @transform_3(%arg0: i32, %arg1: i32) -> (i32, i32) {
    %c0_i32 = arith.constant 0 : i32
    %c0_i32_0 = arith.constant 0 : i32
    %c0_i32_1 = arith.constant 0 : i32
    return %c0_i32, %c0_i32_0 : i32, i32
  }
  func.func @transform_4(%arg0: i32, %arg1: i32) -> (i32, i32) {
    %c0_i32 = arith.constant 0 : i32
    %c0_i32_0 = arith.constant 0 : i32
    %c0_i32_1 = arith.constant 0 : i32
    return %c0_i32, %c0_i32_0 : i32, i32
  }
  func.func @transform_5(%arg0: i32, %arg1: i32) -> (i32, i32) {
    %0 = arith.muli %arg1, %arg0 : i32
    %c0_i32 = arith.constant 0 : i32
    %c0_i32_0 = arith.constant 0 : i32
    return %c0_i32, %0 : i32, i32
  }
}

</mosaic_0001>

<llo_original>
// kernel: tpu_custom_call.1
$region0: #{tpu_custom_call.1}
  #allocation0 [shape = 'u32[]', space=smem, size = 0x4, offset = 0x4, fixed_abs, tag = 'smem constant byte address 0x4 - core index']
  #allocation1 [shape = 'u32[144,128]{1,0:T(1,128)}', space=vmem, size = 0x12000, scoped, tag = 'internal scratch']
  #allocation2 [shape = 'f32[8,1]{1,0:T(8,128)}', space=vmem, size = 0x1000, scoped, tag = 'scratch operand']
  #allocation3 [shape = 'f32[8,1]{1,0:T(8,128)}', space=vmem, size = 0x1000, scoped, tag = 'scratch operand']
  %s0 = inlined_call_operand.vmem [shape: f32[4,256], index: 0, kind: input, shape index: {}]
  %s1 = inlined_call_operand.hbm [shape: f32[8,12], index: 1, kind: input, shape index: {}]
  %s2 = inlined_call_operand.vmem [shape: f32[8,2], index: 2, kind: input, shape index: {}]
  %s3 = inlined_call_operand.vmem [shape: f32[3,256], index: 3, kind: input, shape index: {}]
  %s4 = inlined_call_operand.hbm [shape: f32[256,128], index: 4, kind: input, shape index: {}]
  %s5 = inlined_call_operand.hbm [shape: f32[8,128], index: 5, kind: output, shape index: {}]
  %s6 = sld [smem:[#allocation0]]
  $region73: #{tpu_custom_call.1} parent=0
    _
  %s8 = ssub.s32 1, %s6
  %s9 = scalar_select 0, %s8, %s6
  $region1: #{tpu_custom_call.1} parent=0
    #allocation4 [shape = 'u8[4096]{0}', space=vmem, size = 0x1000, scoped, tag = 'input window, operand 1, single buffered']
    #allocation5 [shape = 's32[2]{0}', space=sflag, size = 0x8, scoped, tag = 'scoped memory for tpu_custom_call.1']
    #allocation6 [shape = 's32[2]{0}', space=sflag, size = 0x8, scoped, tag = 'scoped memory for tpu_custom_call.1']
    #allocation7 [shape = 'u8[131072]{0}', space=vmem, size = 0x20000, scoped, tag = 'input window, operand 4, single buffered']
    #allocation8 [shape = 's32[1]{0}', space=sflag, size = 0x4, scoped, tag = 'scoped memory for tpu_custom_call.1']
    #allocation9 [shape = 'u8[8192]{0}', space=vmem, size = 0x2000, scoped, tag = 'output window, operand 0']
    %10 = vsyncpa [#allocation5], 0
    %11 = vsyncpa [#allocation8], 0
    %12 = vsyncpa [#allocation6], 0
    %s13 = scalar_lea.sflag [#allocation6], 1
    %14 = vsyncpa %s13, 0
    loop: start=0, step=1, limit=4
    $region2: #{tpu_custom_call.1} parent=1 // loop_pre_header
      _
    $region3: #{tpu_custom_call.1} parent=1 // loop_header
      %s16 = sphi 0, %s20
      %p17 = scmp.ge.s32.totalorder %s16, 4
      %s23 = sphi 0, %s35
      %s24 = sphi 0, %s31
      %s25 = sphi 0, %s23
      %s26 = sphi 0, %s24
      %s27 = sphi 0, %s25
      %s28 = sphi 0, %s26
      %s38 = sphi 0, %s40
      %s41 = sphi 0, %s38
      %s42 = sphi 0, %s41
      %s58 = sphi 0, %s42
      %s62 = sphi 0, %s62
      %s64 = sphi 0, %s62
      %s65 = sphi 0, %s64
      %s79 = sphi 0, %s65
      %s83 = sphi 0, %s83
      %s85 = sphi 0, %s83
      %s86 = sphi 0, %s85
      %s100 = sphi 0, %s86
      %s104 = sphi 0, %s104
      %s106 = sphi 0, %s104
      %s107 = sphi 0, %s106
      %s121 = sphi 0, %s107
      %s125 = sphi 0, %s125
      %s127 = sphi 0, %s125
      %s128 = sphi 0, %s127
      %s142 = sphi 0, %s128
      %s150 = sphi 0, %s152
      %s153 = sphi 0, %s150
      %s154 = sphi 0, %s153
      %s170 = sphi 0, %s154
    $region4: #{tpu_custom_call.1} parent=1 // loop_header_branch
      %19 = sbr.rel (%p17) target = $region8
    $region5: #{tpu_custom_call.1} parent=1 // loop_body
      %s21 = ssub.s32 %s16, 1
      %s22 = ssub.s32 %s16, 2
      %s29 = sadd.s32 1, %s24
      %p30 = scmp.ge.s32.totalorder %s29, 1
      %s31 = scalar_select %p30, 0, %s29
      %s32 = sadd.s32 1, %s23
      %s33 = scalar_select %p30, %s32, %s23
      %p34 = scmp.ge.s32.totalorder %s33, 2
      %s35 = scalar_select %p34, 0, %s33
      %s36 = ssub.s32 %s24, %s31
      %p37 = scmp.eq.s32.totalorder %s36, 0
      %s39 = sadd.s32 %s38, 1
      %s40 = scalar_select %p37, %s38, %s39
      %p43 = pneg %p37
      %p44 = scmp.eq.s32.totalorder %s16, 1
      %p45 = por %p43, %p44
      %p46 = scmp.ne.s32.totalorder %s38, %s41
      %p47 = scmp.eq.s32.totalorder %s16, 0
      %p48 = por %p46, %p47
      %p49 = scmp.ne.s32.totalorder %s38, %s41
      %p50 = scmp.eq.s32.totalorder %s21, 1
      %p51 = por %p49, %p50
      %p52 = scmp.ne.s32.totalorder %s41, %s42
      %p53 = scmp.eq.s32.totalorder %s21, 0
      %p54 = por %p52, %p53
      %p55 = scmp.ne.s32.totalorder %s41, %s42
      %p56 = scmp.eq.s32.totalorder %s22, 1
      %p57 = por %p55, %p56
      %p59 = scmp.ne.s32.totalorder %s42, %s58
      %p60 = scmp.eq.s32.totalorder %s22, 0
      %p61 = por %p59, %p60
      %s63 = sadd.s32 %s62, 1
      %p66 = scmp.eq.s32.totalorder %s16, 1
      %p67 = scmp.ne.s32.totalorder %s62, %s64
      %p68 = scmp.eq.s32.totalorder %s16, 0
      %p69 = por %p67, %p68
      %p70 = scmp.ne.s32.totalorder %s62, %s64
      %p71 = scmp.eq.s32.totalorder %s21, 1
      %p72 = por %p70, %p71
      %p73 = scmp.ne.s32.totalorder %s64, %s65
      %p74 = scmp.eq.s32.totalorder %s21, 0
      %p75 = por %p73, %p74
      %p76 = scmp.ne.s32.totalorder %s64, %s65
      %p77 = scmp.eq.s32.totalorder %s22, 1
      %p78 = por %p76, %p77
      %p80 = scmp.ne.s32.totalorder %s65, %s79
      %p81 = scmp.eq.s32.totalorder %s22, 0
      %p82 = por %p80, %p81
      %s84 = sadd.s32 %s83, 1
      %p87 = scmp.eq.s32.totalorder %s16, 1
      %p88 = scmp.ne.s32.totalorder %s83, %s85
      %p89 = scmp.eq.s32.totalorder %s16, 0
      %p90 = por %p88, %p89
      %p91 = scmp.ne.s32.totalorder %s83, %s85
      %p92 = scmp.eq.s32.totalorder %s21, 1
      %p93 = por %p91, %p92
      %p94 = scmp.ne.s32.totalorder %s85, %s86
      %p95 = scmp.eq.s32.totalorder %s21, 0
      %p96 = por %p94, %p95
      %p97 = scmp.ne.s32.totalorder %s85, %s86
      %p98 = scmp.eq.s32.totalorder %s22, 1
      %p99 = por %p97, %p98
      %p101 = scmp.ne.s32.totalorder %s86, %s100
      %p102 = scmp.eq.s32.totalorder %s22, 0
      %p103 = por %p101, %p102
      %s105 = sadd.s32 %s104, 1
      %p108 = scmp.eq.s32.totalorder %s16, 1
      %p109 = scmp.ne.s32.totalorder %s104, %s106
      %p110 = scmp.eq.s32.totalorder %s16, 0
      %p111 = por %p109, %p110
      %p112 = scmp.ne.s32.totalorder %s104, %s106
      %p113 = scmp.eq.s32.totalorder %s21, 1
      %p114 = por %p112, %p113
      %p115 = scmp.ne.s32.totalorder %s106, %s107
      %p116 = scmp.eq.s32.totalorder %s21, 0
      %p117 = por %p115, %p116
      %p118 = scmp.ne.s32.totalorder %s106, %s107
      %p119 = scmp.eq.s32.totalorder %s22, 1
      %p120 = por %p118, %p119
      %p122 = scmp.ne.s32.totalorder %s107, %s121
      %p123 = scmp.eq.s32.totalorder %s22, 0
      %p124 = por %p122, %p123
      %s126 = sadd.s32 %s125, 1
      %p129 = scmp.eq.s32.totalorder %s16, 1
      %p130 = scmp.ne.s32.totalorder %s125, %s127
      %p131 = scmp.eq.s32.totalorder %s16, 0
      %p132 = por %p130, %p131
      %p133 = scmp.ne.s32.totalorder %s125, %s127
      %p134 = scmp.eq.s32.totalorder %s21, 1
      %p135 = por %p133, %p134
      %p136 = scmp.ne.s32.totalorder %s127, %s128
      %p137 = scmp.eq.s32.totalorder %s21, 0
      %p138 = por %p136, %p137
      %p139 = scmp.ne.s32.totalorder %s127, %s128
      %p140 = scmp.eq.s32.totalorder %s22, 1
      %p141 = por %p139, %p140
      %p143 = scmp.ne.s32.totalorder %s128, %s142
      %p144 = scmp.eq.s32.totalorder %s22, 0
      %p145 = por %p143, %p144
      %s146 = smul.u32 %s24, %s23
      %s147 = smul.u32 %s31, %s35
      %s148 = ssub.s32 %s146, %s147
      %p149 = scmp.eq.s32.totalorder %s148, 0
      %s151 = sadd.s32 %s150, 1
      %s152 = scalar_select %p149, %s150, %s151
      %p155 = pneg %p149
      %p156 = scmp.eq.s32.totalorder %s16, 1
      %p157 = por %p155, %p156
      %p158 = scmp.ne.s32.totalorder %s150, %s153
      %p159 = scmp.eq.s32.totalorder %s16, 0
      %p160 = por %p158, %p159
      %p161 = scmp.ne.s32.totalorder %s150, %s153
      %p162 = scmp.eq.s32.totalorder %s21, 1
      %p163 = por %p161, %p162
      %p164 = scmp.ne.s32.totalorder %s153, %s154
      %p165 = scmp.eq.s32.totalorder %s21, 0
      %p166 = por %p164, %p165
      %p167 = scmp.ne.s32.totalorder %s153, %s154
      %p168 = scmp.eq.s32.totalorder %s22, 1
      %p169 = por %p167, %p168
      %p171 = scmp.ne.s32.totalorder %s154, %s170
      %p172 = scmp.eq.s32.totalorder %s22, 0
      %p173 = por %p171, %p172
      %p174 = scmp.le.s32.totalorder 1, %s16
      %p175 = scmp.lt.s32.totalorder %s16, 3
      %p176 = pnand %p174, %p175
      %p177 = pneg %p176
      // Predicated region
      $region9: #{tpu_custom_call.1} parent=5 // pred_check
        _
      $region10: #{tpu_custom_call.1} parent=5 // pred_check_branch
        %179 = sbr.rel (%p176) target = $region12
      $region11: #{tpu_custom_call.1} parent=5 // pred_region
        %s180 = ssub.s32 %s16, 1
        // Predicated region
        $region13: #{tpu_custom_call.1} parent=11 // pred_check
          %p181 = pneg %p54
        $region14: #{tpu_custom_call.1} parent=11 // pred_check_branch
          %183 = sbr.rel (%p181) target = $region16
        $region15: #{tpu_custom_call.1} parent=11 // pred_region
          %s184 = smul.u32 2, %s26
          %p185 = scmp.lt.s32.totalorder %s184, 1
          %s186 = scalar_select %p185, %s184, 1
          %s187 = smul.addr %s186, 4
          %s188 = scalar_lea.vmem %s0, %s187
          %s189 = smul.u32 2, %s26
        $region16: #{tpu_custom_call.1} parent=11 // pred_fallthru
          _
        // Predicated region
        $region17: #{tpu_custom_call.1} parent=11 // pred_check
          %p190 = pneg %p75
        $region18: #{tpu_custom_call.1} parent=11 // pred_check_branch
          %192 = sbr.rel (%p190) target = $region20
        $region19: #{tpu_custom_call.1} parent=11 // pred_region
          %s194 = ssub.s32 128, 128
          %195 = vsyncadd [#allocation5], %s194
          %s197 = sshll.u32 [#allocation4], 4
          %s198 = int_to_ptr.vmem [resolvable:$true] %s197
          %200 = dma.hbm_to_vmem [thread:$0]  %s1, 128, %s198, [#allocation5]
        $region20: #{tpu_custom_call.1} parent=11 // pred_fallthru
          _
        // Predicated region
        $region21: #{tpu_custom_call.1} parent=11 // pred_check
          %p201 = pneg %p96
        $region22: #{tpu_custom_call.1} parent=11 // pred_check_branch
          %203 = sbr.rel (%p201) target = $region24
        $region23: #{tpu_custom_call.1} parent=11 // pred_region
          _
        $region24: #{tpu_custom_call.1} parent=11 // pred_fallthru
          _
        // Predicated region
        $region25: #{tpu_custom_call.1} parent=11 // pred_check
          %p204 = pneg %p117
        $region26: #{tpu_custom_call.1} parent=11 // pred_check_branch
          %206 = sbr.rel (%p204) target = $region28
        $region27: #{tpu_custom_call.1} parent=11 // pred_region
          _
        $region28: #{tpu_custom_call.1} parent=11 // pred_fallthru
          _
        // Predicated region
        $region29: #{tpu_custom_call.1} parent=11 // pred_check
          %p207 = pneg %p138
        $region30: #{tpu_custom_call.1} parent=11 // pred_check_branch
          %209 = sbr.rel (%p207) target = $region32
        $region31: #{tpu_custom_call.1} parent=11 // pred_region
          %s211 = ssub.s32 4096, 4096
          %212 = vsyncadd [#allocation8], %s211
          %s213 = sshll.u32 [#allocation7], 4
          %s214 = int_to_ptr.vmem [resolvable:$true] %s213
          %219 = dma.hbm_to_vmem [thread:$0]  %s4, 4096, %s214, [#allocation8], 128, 128, 8
        $region32: #{tpu_custom_call.1} parent=11 // pred_fallthru
          _
      $region12: #{tpu_custom_call.1} parent=5 // pred_fallthru
        _
      %p220 = scmp.lt.s32.totalorder %s16, 2
      // Predicated region
      $region33: #{tpu_custom_call.1} parent=5 // pred_check
        %p221 = pneg %p220
      $region34: #{tpu_custom_call.1} parent=5 // pred_check_branch
        %223 = sbr.rel (%p221) target = $region36
      $region35: #{tpu_custom_call.1} parent=5 // pred_region
        _
      $region36: #{tpu_custom_call.1} parent=5 // pred_fallthru
        _
      %p224 = scmp.le.s32.totalorder 1, %s16
      %p225 = scmp.lt.s32.totalorder %s16, 3
      %p226 = pnand %p224, %p225
      %p227 = pneg %p226
      // Predicated region
      $region37: #{tpu_custom_call.1} parent=5 // pred_check
        _
      $region38: #{tpu_custom_call.1} parent=5 // pred_check_branch
        %229 = sbr.rel (%p226) target = $region40
      $region39: #{tpu_custom_call.1} parent=5 // pred_region
        %s230 = ssub.s32 %s16, 1
        // Predicated region
        $region41: #{tpu_custom_call.1} parent=39 // pred_check
          %p231 = pneg %p75
        $region42: #{tpu_custom_call.1} parent=39 // pred_check_branch
          %233 = sbr.rel (%p231) target = $region44
        $region43: #{tpu_custom_call.1} parent=39 // pred_region
          %234 = dma.done [#allocation5], 128
        $region44: #{tpu_custom_call.1} parent=39 // pred_fallthru
          _
        // Predicated region
        $region45: #{tpu_custom_call.1} parent=39 // pred_check
          %p235 = pneg %p138
        $region46: #{tpu_custom_call.1} parent=39 // pred_check_branch
          %237 = sbr.rel (%p235) target = $region48
        $region47: #{tpu_custom_call.1} parent=39 // pred_region
          %238 = dma.done [#allocation8], 4096
        $region48: #{tpu_custom_call.1} parent=39 // pred_fallthru
          _
        %s239 = smul.u32 2, %s26
        %p240 = scmp.lt.s32.totalorder %s239, 1
        %s241 = scalar_select %p240, %s239, 1
        %s242 = smul.addr %s241, 4
        %s243 = scalar_lea.vmem %s0, %s242
        %p244 = pneg %p54
        %p245 = pneg %p51
        %p246 = pneg %p75
        %p247 = pneg %p72
        %p248 = pneg %p96
        %p249 = pneg %p93
        %p250 = pneg %p117
        %p251 = pneg %p114
        %p252 = pneg %p138
        %p253 = pneg %p135
        %p254 = pneg %p166
        %p255 = pneg %p163
        %s256 = sand.u32 %s153, 1
        %s257 = scalar_lea.sflag [#allocation6], %s256
        %s258 = sand.u32 %s153, 1
        %s259 = smul.addr %s258, 8
        %s260 = scalar_lea.vmem [#allocation9], %s259
        %s261 = smul.u32 2, %s26
        %p262 = scmp.lt.s32.totalorder %s261, 1
        %s263 = scalar_select %p262, %s261, 1
        %s264 = smul.addr %s263, 4
        %s265 = scalar_lea.vmem %s0, %s264
        %s266 = smul.u32 2, %s26
        %s267 = smul.u32 %s26, %s25
        %p268 = scmp.eq.s32.totalorder %s25, 0
        %p269 = scmp.eq.s32.totalorder %s26, 0
        %p270 = pnand %p268, %p269
        %p271 = pneg %p270
        // Predicated region
        $region49: #{tpu_custom_call.1} parent=39 // pred_check
          _
        $region50: #{tpu_custom_call.1} parent=39 // pred_check_branch
          %273 = sbr.rel (%p270) target = $region52
        $region51: #{tpu_custom_call.1} parent=39 // pred_region
          %vm274 = vcmask 7168
          %275 = vst.msk [vmem:[#allocation2] sm:$0xff] %vm274, 0.0
          %276 = vst.msk [vmem:[#allocation3] sm:$0xff] %vm274, 0.0
        $region52: #{tpu_custom_call.1} parent=39 // pred_fallthru
          _
        %v277 = vld [vmem:[%s265] sm:$0xff]
        %v278 = vld [vmem:[%s3] sm:$0x77]
        %v280 = vcombine.high %v277, %v277
        %282 = vrot.lane.b32.xlu0 %v277, 1
        %v283 = vpop.permute.xlu0 %282
        %284 = vrot.lane.b32.xlu0 %v280, 1
        %v285 = vpop.permute.xlu0 %284
        %v286 = vlaneseq
        %v287 = vand.u32 %v286, 127
        %vm288 = vcmp.lt.s32.totalorder %v287, 1
        %v289 = vsel %vm288, %v283, %v285
        %v290 = vsel %vm288, %v285, %v283
        %v292 = vlaneseq
        %v293 = vshrl.u32 %v292, 7
        %v294 = vsub.s32 0, %v293
        %v295 = vrot.slane %v278, %v294
        %v296 = vlaneseq
        %v297 = vshrl.u32 %v296, 7
        %v298 = vsub.s32 4, %v297
        %v299 = vrot.slane %v278, %v298
        %v302 = vlaneseq
        %v303 = vshrl.u32 %v302, 7
        %v304 = vsub.s32 0, %v303
        %v305 = vrot.slane %v295, %v304
        %v306 = vlaneseq
        %v307 = vshrl.u32 %v306, 7
        %v308 = vsub.s32 0, %v307
        %v309 = vrot.slane %v299, %v308
        %v310 = vmul.f32 %v290, %v305
        %v311 = vmul.f32 %v289, %v309
        %312 = vrot.lane.b32.xlu0 %v277, 127
        %v313 = vpop.permute.xlu0 %312
        %314 = vrot.lane.b32.xlu0 %v280, 127
        %v315 = vpop.permute.xlu0 %314
        %vm316 = vcmp.lt.s32.totalorder %v287, 127
        %v317 = vsel %vm316, %v313, %v315
        %v318 = vsel %vm316, %v315, %v313
        %v319 = vlaneseq
        %v320 = vshrl.u32 %v319, 7
        %v321 = vsub.s32 2, %v320
        %v322 = vrot.slane %v278, %v321
        %v323 = vlaneseq
        %v324 = vshrl.u32 %v323, 7
        %v325 = vsub.s32 6, %v324
        %v326 = vrot.slane %v278, %v325
        %v329 = vlaneseq
        %v330 = vshrl.u32 %v329, 7
        %v331 = vsub.s32 2, %v330
        %v332 = vrot.slane %v322, %v331
        %v333 = vlaneseq
        %v334 = vshrl.u32 %v333, 7
        %v335 = vsub.s32 2, %v334
        %v336 = vrot.slane %v326, %v335
        %v337 = vmul.f32 %v317, %v332
        %v338 = vmul.f32 %v318, %v336
        %v339 = vcombine.low %v277, %v277
        %vm341 = vcmask 1043456
        %v342 = vsel %vm341, %v310, %v339
        %v343 = vsel %vm341, %v311, %v277
        %v344 = vld [vmem:[#allocation4] sm:$0xff]
        %vm345 = vcmask 97280
        %v347 = vsel %vm345, %v344, 0
        %v350 = vsel %vm341, %v337, 0
        %v353 = vsel %vm341, %v338, 0
        %355 = vmatprep.subr.mxu0 %v343
        %356 = vmatpush1.msra.mxu0 %v342
        %357 = vmatprep.subr.mxu0 %v353
        %358 = vmatpush1.msra.mxu0 %v350
        %359 = vmatprep.subr.mxu0 0.0
        %360 = vmatpush1.msra.mxu0 0.0
        %361 = vmatprep.subr.mxu0 0.0
        %362 = vmatpush1.msra.mxu0 0.0
        %363 = vmatprep.subr.mxu0 0.0
        %364 = vmatpush1.msra.mxu0 0.0
        %365 = vmatprep.subr.mxu0 0.0
        %366 = vmatpush1.msra.mxu0 0.0
        %367 = vmatprep.subr.mxu0 0.0
        %368 = vmatpush1.msra.mxu0 0.0
        %369 = vmatprep.subr.mxu0 0.0
        %370 = vmatpush1.msra.mxu0 0.0
        %371 = vmatprep.subr.mxu0 0.0
        %372 = vmatpush1.msra.mxu0 0.0
        %373 = vmatprep.subr.mxu0 0.0
        %374 = vmatpush1.msra.mxu0 0.0
        %375 = vmatprep.subr.mxu0 0.0
        %376 = vmatpush1.msra.mxu0 0.0
        %377 = vmatprep.subr.mxu0 0.0
        %378 = vmatpush1.msra.mxu0 0.0
        %379 = vmatprep.subr.mxu0 0.0
        %380 = vmatpush1.msra.mxu0 0.0
        %381 = vmatprep.subr.mxu0 0.0
        %382 = vmatpush1.msra.mxu0 0.0
        %383 = vmatprep.subr.mxu0 0.0
        %384 = vmatpush1.msra.mxu0 0.0
        %385 = vmatprep.subr.mxu0 0.0
        %386 = vmatpush1.msra.mxu0 0.0
        %387 = vmatprep.subr.mxu0 0.0
        %388 = vmatpush1.msra.mxu0 0.0
        %389 = vmatprep.subr.mxu0 0.0
        %390 = vmatpush1.msra.mxu0 0.0
        %391 = vmatprep.subr.mxu0 0.0
        %392 = vmatpush1.msra.mxu0 0.0
        %393 = vmatprep.subr.mxu0 0.0
        %394 = vmatpush1.msra.mxu0 0.0
        %395 = vmatprep.subr.mxu0 0.0
        %396 = vmatpush1.msra.mxu0 0.0
        %397 = vmatprep.subr.mxu0 0.0
        %398 = vmatpush1.msra.mxu0 0.0
        %399 = vmatprep.subr.mxu0 0.0
        %400 = vmatpush1.msra.mxu0 0.0
        %401 = vmatprep.subr.mxu0 0.0
        %402 = vmatpush1.msra.mxu0 0.0
        %403 = vmatprep.subr.mxu0 0.0
        %404 = vmatpush1.msra.mxu0 0.0
        %405 = vmatprep.subr.mxu0 0.0
        %406 = vmatpush1.msra.mxu0 0.0
        %407 = vmatprep.subr.mxu0 0.0
        %408 = vmatpush1.msra.mxu0 0.0
        %409 = vmatprep.subr.mxu0 0.0
        %410 = vmatpush1.msra.mxu0 0.0
        %411 = vmatprep.subr.mxu0 0.0
        %412 = vmatpush1.msra.mxu0 0.0
        %413 = vmatprep.subr.mxu0 0.0
        %414 = vmatpush1.msra.mxu0 0.0
        %415 = vmatprep.subr.mxu0 0.0
        %416 = vmatpush1.msra.mxu0 0.0
        %417 = vmatprep.subr.mxu0 0.0
        %418 = vmatpush1.msra.mxu0 0.0
        %419 = vmatprep.mubr.f32.mxu0 0.0
        %420 = vmatmul.mubr.f32.gmra.mrb[0].mxu0 %v347
        %v421 = vpop.f32.mrb[0].mxu0
        %v422 = vadd.f32 0.0, %v421
        %v423 = vpop.f32.mrb[0].mxu0
        %v424 = vadd.f32 0.0, %v423
        %425 = vdwg.mxu0
        // Predicated region
        $region53: #{tpu_custom_call.1} parent=39 // pred_check
          %p426 = pneg %p268
        $region54: #{tpu_custom_call.1} parent=39 // pred_check_branch
          %428 = sbr.rel (%p426) target = $region56
        $region55: #{tpu_custom_call.1} parent=39 // pred_region
          %v429 = vld [vmem:[#allocation2] sm:$0xff]
          %v430 = vadd.f32 %v422, %v424
          %431 = vadd.xlane.f32.xlu0 %v430
          %v432 = vpop.xlane.xlu0 %431
          %v433 = vadd.f32 %v429, %v432
          %vm434 = vcmask 7168
          %435 = vst.msk [vmem:[#allocation2] sm:$0xff] %vm434, %v433
          %v436 = vld [vmem:[#allocation3] sm:$0xff]
          %v437 = vmul.f32 %v422, %v422
          %v438 = vmul.f32 %v424, %v424
          %v439 = vadd.f32 %v437, %v438
          %440 = vadd.xlane.f32.xlu0 %v439
          %v441 = vpop.xlane.xlu0 %440
          %v442 = vadd.f32 %v436, %v441
          %443 = vst.msk [vmem:[#allocation3] sm:$0xff] %vm434, %v442
        $region56: #{tpu_custom_call.1} parent=39 // pred_fallthru
          _
        %p444 = scmp.eq.s32.totalorder %s25, 1
        // Predicated region
        $region57: #{tpu_custom_call.1} parent=39 // pred_check
          %p445 = pneg %p444
        $region58: #{tpu_custom_call.1} parent=39 // pred_check_branch
          %447 = sbr.rel (%p445) target = $region60
        $region59: #{tpu_custom_call.1} parent=39 // pred_region
          %v448 = vld [vmem:[#allocation2] sm:$0xff]
          %v449 = vmul.f32 %v448, 0.00390625
          %v450 = vld [vmem:[#allocation3] sm:$0xff]
          %v451 = vmul.f32 %v450, 0.00390625
          %v452 = vmul.f32 %v449, %v449
          %v453 = vsub.f32 %v451, %v452
          %v454 = vld [vmem:[%s2] sm:$0xff]
          %v455 = vadd.f32 %v453, 1e-05
          %v456 = vrsqrt.pop %v455
          %v457 = vmul.f32 %v454, %v456
          %v458 = vmul.f32 %v449, %v457
          %460 = vrot.lane.b32.xlu0 %v458, 1
          %v461 = vpop.permute.xlu0 %460
          %v463 = vsub.f32 %v454, %v461
          %465 = vset.pattern.permute.xlu0 0
          %466 = vperm.xlu0 %465, %v457
          %v467 = vpop.permute.xlu0 %466
          %v469 = vmul.f32 %v422, %v467
          %v470 = vmul.f32 %v424, %v467
          %472 = vset.pattern.permute.xlu0 1
          %473 = vperm.xlu0 %472, %v463
          %v474 = vpop.permute.xlu0 %473
          %v476 = vadd.f32 %v469, %v474
          %v477 = vadd.f32 %v470, %v474
          %v478 = vmax.f32 %v476, 0.0
          %v479 = vmax.f32 %v477, 0.0
          %480 = vrot.lane.b32.xlu0 %v478, 127
          %v481 = vpop.permute.xlu0 %480
          %482 = vrot.lane.b32.xlu0 %v479, 127
          %v483 = vpop.permute.xlu0 %482
          %v484 = vsel %vm316, %v481, %v483
          %v485 = vsel %vm316, %v483, %v481
          %v486 = vmax.f32 %v478, %v484
          %v487 = vmax.f32 %v479, %v485
          %v488 = vld [vmem:[#allocation7] sm:$0xff]
          %v489 = vld [vmem:[#allocation7 + $0x8] sm:$0xff]
          %v490 = vld [vmem:[#allocation7 + $0x10] sm:$0xff]
          %v491 = vld [vmem:[#allocation7 + $0x18] sm:$0xff]
          %v492 = vld [vmem:[#allocation7 + $0x20] sm:$0xff]
          %v493 = vld [vmem:[#allocation7 + $0x28] sm:$0xff]
          %v494 = vld [vmem:[#allocation7 + $0x30] sm:$0xff]
          %v495 = vld [vmem:[#allocation7 + $0x38] sm:$0xff]
          %v496 = vld [vmem:[#allocation7 + $0x40] sm:$0xff]
          %v497 = vld [vmem:[#allocation7 + $0x48] sm:$0xff]
          %v498 = vld [vmem:[#allocation7 + $0x50] sm:$0xff]
          %v499 = vld [vmem:[#allocation7 + $0x58] sm:$0xff]
          %v500 = vld [vmem:[#allocation7 + $0x60] sm:$0xff]
          %v501 = vld [vmem:[#allocation7 + $0x68] sm:$0xff]
          %v502 = vld [vmem:[#allocation7 + $0x70] sm:$0xff]
          %v503 = vld [vmem:[#allocation7 + $0x78] sm:$0xff]
          %v504 = vld [vmem:[#allocation7 + $0x80] sm:$0xff]
          %v505 = vld [vmem:[#allocation7 + $0x88] sm:$0xff]
          %v506 = vld [vmem:[#allocation7 + $0x90] sm:$0xff]
          %v507 = vld [vmem:[#allocation7 + $0x98] sm:$0xff]
          %v508 = vld [vmem:[#allocation7 + $0xa0] sm:$0xff]
          %v509 = vld [vmem:[#allocation7 + $0xa8] sm:$0xff]
          %v510 = vld [vmem:[#allocation7 + $0xb0] sm:$0xff]
          %v511 = vld [vmem:[#allocation7 + $0xb8] sm:$0xff]
          %v512 = vld [vmem:[#allocation7 + $0xc0] sm:$0xff]
          %v513 = vld [vmem:[#allocation7 + $0xc8] sm:$0xff]
          %v514 = vld [vmem:[#allocation7 + $0xd0] sm:$0xff]
          %v515 = vld [vmem:[#allocation7 + $0xd8] sm:$0xff]
          %v516 = vld [vmem:[#allocation7 + $0xe0] sm:$0xff]
          %v517 = vld [vmem:[#allocation7 + $0xe8] sm:$0xff]
          %v518 = vld [vmem:[#allocation7 + $0xf0] sm:$0xff]
          %v519 = vld [vmem:[#allocation7 + $0xf8] sm:$0xff]
          %520 = vmatprep.subr.mxu0 0.0
          %521 = vmatpush1.msra.mxu0 %v488
          %522 = vmatprep.subr.mxu0 0.0
          %523 = vmatpush1.msra.mxu0 %v489
          %524 = vmatprep.subr.mxu0 0.0
          %525 = vmatpush1.msra.mxu0 %v490
          %526 = vmatprep.subr.mxu0 0.0
          %527 = vmatpush1.msra.mxu0 %v491
          %528 = vmatprep.subr.mxu0 0.0
          %529 = vmatpush1.msra.mxu0 %v492
          %530 = vmatprep.subr.mxu0 0.0
          %531 = vmatpush1.msra.mxu0 %v493
          %532 = vmatprep.subr.mxu0 0.0
          %533 = vmatpush1.msra.mxu0 %v494
          %534 = vmatprep.subr.mxu0 0.0
          %535 = vmatpush1.msra.mxu0 %v495
          %536 = vmatprep.subr.mxu0 0.0
          %537 = vmatpush1.msra.mxu0 %v496
          %538 = vmatprep.subr.mxu0 0.0
          %539 = vmatpush1.msra.mxu0 %v497
          %540 = vmatprep.subr.mxu0 0.0
          %541 = vmatpush1.msra.mxu0 %v498
          %542 = vmatprep.subr.mxu0 0.0
          %543 = vmatpush1.msra.mxu0 %v499
          %544 = vmatprep.subr.mxu0 0.0
          %545 = vmatpush1.msra.mxu0 %v500
          %546 = vmatprep.subr.mxu0 0.0
          %547 = vmatpush1.msra.mxu0 %v501
          %548 = vmatprep.subr.mxu0 0.0
          %549 = vmatpush1.msra.mxu0 %v502
          %550 = vmatprep.subr.mxu0 0.0
          %551 = vmatpush1.msra.mxu0 %v503
          %552 = vmatprep.subr.mxu0 0.0
          %553 = vmatpush1.msra.mxu0 %v504
          %554 = vmatprep.subr.mxu0 0.0
          %555 = vmatpush1.msra.mxu0 %v505
          %556 = vmatprep.subr.mxu0 0.0
          %557 = vmatpush1.msra.mxu0 %v506
          %558 = vmatprep.subr.mxu0 0.0
          %559 = vmatpush1.msra.mxu0 %v507
          %560 = vmatprep.subr.mxu0 0.0
          %561 = vmatpush1.msra.mxu0 %v508
          %562 = vmatprep.subr.mxu0 0.0
          %563 = vmatpush1.msra.mxu0 %v509
          %564 = vmatprep.subr.mxu0 0.0
          %565 = vmatpush1.msra.mxu0 %v510
          %566 = vmatprep.subr.mxu0 0.0
          %567 = vmatpush1.msra.mxu0 %v511
          %568 = vmatprep.subr.mxu0 0.0
          %569 = vmatpush1.msra.mxu0 %v512
          %570 = vmatprep.subr.mxu0 0.0
          %571 = vmatpush1.msra.mxu0 %v513
          %572 = vmatprep.subr.mxu0 0.0
          %573 = vmatpush1.msra.mxu0 %v514
          %574 = vmatprep.subr.mxu0 0.0
          %575 = vmatpush1.msra.mxu0 %v515
          %576 = vmatprep.subr.mxu0 0.0
          %577 = vmatpush1.msra.mxu0 %v516
          %578 = vmatprep.subr.mxu0 0.0
          %579 = vmatpush1.msra.mxu0 %v517
          %580 = vmatprep.subr.mxu0 0.0
          %581 = vmatpush1.msra.mxu0 %v518
          %582 = vmatprep.subr.mxu0 0.0
          %583 = vmatpush1.msra.mxu0 %v519
          %584 = vmatprep.mubr.f32.mxu0 %v487
          %585 = vmatmul.mubr.f32.gmra.mrb[0].mxu0 %v486
          %v586 = vpop.f32.mrb[0].mxu0
          %v587 = vadd.f32 0.0, %v586
          %v588 = vpop.f32.mrb[0].mxu0
          %589 = vdwg.mxu0
          %590 = vst [vmem:[%s260] sm:$0xff] %v587
        $region60: #{tpu_custom_call.1} parent=39 // pred_fallthru
          _
        %s591 = sand.u32 %s153, 1
        %s592 = scalar_lea.sflag [#allocation6], %s591
        %s593 = sand.u32 %s153, 1
        %s594 = smul.addr %s593, 8
        %s595 = scalar_lea.vmem [#allocation9], %s594
        // Predicated region
        $region61: #{tpu_custom_call.1} parent=39 // pred_check
          %p596 = pneg %p163
        $region62: #{tpu_custom_call.1} parent=39 // pred_check_branch
          %598 = sbr.rel (%p596) target = $region64
        $region63: #{tpu_custom_call.1} parent=39 // pred_region
          %s599 = smul.u32 %s26, %s25
          %s601 = ssub.s32 128, 128
          %602 = vsyncadd %s592, %s601
          %s603 = smul.addr %s599, 128
          %s604 = scalar_lea.hbm %s5, %s603
          %s606 = sshll.u32 %s595, 4
          %s607 = int_to_ptr.vmem [resolvable:$true] %s606
          %609 = dma.vmem_to_hbm [thread:$0]  %s607, 128, %s604, %s592
        $region64: #{tpu_custom_call.1} parent=39 // pred_fallthru
          _
      $region40: #{tpu_custom_call.1} parent=5 // pred_fallthru
        _
      %p610 = scmp.le.s32.totalorder 2, %s16
      // Predicated region
      $region65: #{tpu_custom_call.1} parent=5 // pred_check
        %p611 = pneg %p610
      $region66: #{tpu_custom_call.1} parent=5 // pred_check_branch
        %613 = sbr.rel (%p611) target = $region68
      $region67: #{tpu_custom_call.1} parent=5 // pred_region
        %s614 = ssub.s32 %s16, 2
        // Predicated region
        $region69: #{tpu_custom_call.1} parent=67 // pred_check
          %p615 = pneg %p169
        $region70: #{tpu_custom_call.1} parent=67 // pred_check_branch
          %617 = sbr.rel (%p615) target = $region72
        $region71: #{tpu_custom_call.1} parent=67 // pred_region
          %s618 = sand.u32 %s154, 1
          %s619 = scalar_lea.sflag [#allocation6], %s618
          %s620 = sand.u32 %s154, 1
          %s621 = smul.addr %s620, 8
          %s622 = scalar_lea.vmem [#allocation9], %s621
          %623 = dma.done %s619, 128
        $region72: #{tpu_custom_call.1} parent=67 // pred_fallthru
          _
      $region68: #{tpu_custom_call.1} parent=5 // pred_fallthru
        _
    $region6: #{tpu_custom_call.1} parent=1 // loop_footer
      %s20 = sadd.s32 1, %s16
    $region7: #{tpu_custom_call.1} parent=1 // loop_footer_branch
      %15 = sbr.rel target = $region3
    $region8: #{tpu_custom_call.1} parent=1 // loop_exit
      _
    %624 = vsyncpa [#allocation5], 1
    %s625 = scalar_lea.sflag [#allocation5], 1
    %626 = vsyncpa %s625, 1
    %627 = vsyncpa [#allocation8], 1
    %628 = vsyncpa [#allocation6], 1
    %s629 = scalar_lea.sflag [#allocation6], 1
    %630 = vsyncpa %s629, 1

</llo_original>
